<compile_context>
chip_gen: v7x
topology: tpu7x:2x2x1
jax: 0.10.0
libtpu: 0.0.40
codegen_flags: <defaults>
</compile_context>

<pallas_src>
import functools
import math

import jax
import jax.numpy as jnp
import numpy as np
from jax.experimental import pallas as pl
from jax.experimental.pallas import tpu as pltpu

HIDDEN = (512, 128)
MAX_BATCH_TILE = 512  # rows per grid step for very large batches


def _round_up(x, m):
    return ((x + m - 1) // m) * m


def _epilogue_dtype():
    """bf16 elementwise epilogues on chips with bf16 VALUs (v6e/v7x), f32 otherwise."""
    try:
        kind = jax.devices()[0].device_kind.lower()
    except Exception:
        kind = ""
    if any(t in kind for t in ("v2", "v3", "v4", "v5")):
        return jnp.float32
    return jnp.bfloat16


# --------------------------------------------------------------------------- #
# Kernel
# --------------------------------------------------------------------------- #
def _qnet_kernel(x_ref, w1_ref, b1_ref, w2_ref, b2_ref, wh_ref, bh_ref, out_ref):
    # Layer 1: cast x to bf16 in-kernel, f32 MXU accumulation.
    x = x_ref[...].astype(jnp.bfloat16)
    h = jnp.dot(x, w1_ref[...], preferred_element_type=jnp.float32)
    # Bias + ReLU in the bias dtype (bf16 on v6e/v7x, f32 on v5e), then bf16
    # for the next MXU pass.
    h = jnp.maximum(h.astype(b1_ref.dtype) + b1_ref[...], 0.0).astype(jnp.bfloat16)

    # Layer 2.
    h = jnp.dot(h, w2_ref[...], preferred_element_type=jnp.float32)
    h = jnp.maximum(h.astype(b2_ref.dtype) + b2_ref[...], 0.0).astype(jnp.bfloat16)

    # Head (dueling state-value already folded into wh/bh at prep time).
    out_ref[...] = (
        jnp.dot(h, wh_ref[...], preferred_element_type=jnp.float32) + bh_ref[...]
    )


# --------------------------------------------------------------------------- #
# One-time parameter preparation (hoisted out of the per-call path)
# --------------------------------------------------------------------------- #
def prepare_params(params, *, use_dueling, epilogue_dtype=None):
    """Fold the dueling head into the advantage weights and cast to kernel dtypes.

    adv + state_value == x @ (Wa + Ws.broadcast) + (ba + bs), so the dueling
    add is free at param-prep time.
    """
    if epilogue_dtype is None:
        epilogue_dtype = _epilogue_dtype()
    if use_dueling:
        wh = params["wa"] + params["ws"]        # (128, A) + (128, 1) broadcast
        bh = params["ba"] + params["bs"]        # (1,   A) + (1,   1) broadcast
    else:
        wh = params["wa"]
        bh = params["ba"]
    return dict(
        w1=params["w1"].astype(jnp.bfloat16),
        b1=params["b1"].astype(epilogue_dtype),
        w2=params["w2"].astype(jnp.bfloat16),
        b2=params["b2"].astype(epilogue_dtype),
        wh=wh.astype(jnp.bfloat16),
        bh=bh.astype(jnp.float32),              # final bias stays f32 (f32 output)
    )


# --------------------------------------------------------------------------- #
# Forward
# --------------------------------------------------------------------------- #
@jax.jit
def qnetwork_forward(x, prep):
    """QNetwork forward in one Pallas call. Returns (batch, action_size) f32."""
    batch, state_size = x.shape
    h1 = prep["w1"].shape[1]
    h2 = prep["w2"].shape[1]
    action_size = prep["wh"].shape[1]

    # Batch tiling:
    #   small batch  -> single grid step (pad rows to a sublane multiple)
    #   mid batch    -> 2 grid steps so both TensorCores are used on v7x
    #   large batch  -> MAX_BATCH_TILE-row tiles on a parallel grid axis
    if batch <= 256:
        batch_tile = _round_up(batch, 8)
    elif batch <= 2 * MAX_BATCH_TILE:
        batch_tile = _round_up(pl.cdiv(batch, 2), 8)
    else:
        batch_tile = MAX_BATCH_TILE
    batch_pad = _round_up(batch, batch_tile)
    x_in = jnp.pad(x, ((0, batch_pad - batch), (0, 0))) if batch_pad != batch else x
    grid = (batch_pad // batch_tile,)

    flops = 2 * batch_pad * (state_size * h1 + h1 * h2 + h2 * action_size)
    bytes_accessed = (
        x_in.size * 4
        + (prep["w1"].size + prep["w2"].size + prep["wh"].size) * 2
        + prep["b1"].size * prep["b1"].dtype.itemsize
        + prep["b2"].size * prep["b2"].dtype.itemsize
        + prep["bh"].size * 4
        + batch_pad * action_size * 4
    )

    out = pl.pallas_call(
        _qnet_kernel,
        out_shape=jax.ShapeDtypeStruct((batch_pad, action_size), jnp.float32),
        grid=grid,
        in_specs=[
            pl.BlockSpec((batch_tile, state_size), lambda i: (i, 0)),  # x tile
            pl.BlockSpec((state_size, h1), lambda i: (0, 0)),          # W1
            pl.BlockSpec((1, h1), lambda i: (0, 0)),                   # b1
            pl.BlockSpec((h1, h2), lambda i: (0, 0)),                  # W2
            pl.BlockSpec((1, h2), lambda i: (0, 0)),                   # b2
            pl.BlockSpec((h2, action_size), lambda i: (0, 0)),         # fused head W
            pl.BlockSpec((1, action_size), lambda i: (0, 0)),          # fused head b
        ],
        out_specs=pl.BlockSpec((batch_tile, action_size), lambda i: (i, 0)),
        compiler_params=pltpu.CompilerParams(
            dimension_semantics=("parallel",),
            vmem_limit_bytes=32 * 1024 * 1024,
        ),
        cost_estimate=pl.CostEstimate(
            flops=flops, transcendentals=0, bytes_accessed=bytes_accessed),
    )(x_in, prep["w1"], prep["b1"], prep["w2"], prep["b2"],
      prep["wh"], prep["bh"])

    return out[:batch] if batch_pad != batch else out


# --------------------------------------------------------------------------- #
# Init + reference + self-check
# --------------------------------------------------------------------------- #
def init_params(key, state_size, action_size):
    """PyTorch-style Linear init: U(-1/sqrt(fan_in), 1/sqrt(fan_in)).

    Weights are stored transposed (in, out) relative to nn.Linear, so the
    kernel computes y = x @ W + b directly."""
    def linear(k, fan_in, fan_out):
        kw, kb = jax.random.split(k)
        bound = 1.0 / math.sqrt(fan_in)
        w = jax.random.uniform(kw, (fan_in, fan_out), jnp.float32, -bound, bound)
        b = jax.random.uniform(kb, (1, fan_out), jnp.float32, -bound, bound)
        return w, b

    k1, k2, k3, k4 = jax.random.split(key, 4)
    w1, b1 = linear(k1, state_size, HIDDEN[0])
    w2, b2 = linear(k2, HIDDEN[0], HIDDEN[1])
    wa, ba = linear(k3, HIDDEN[1], action_size)
    ws, bs = linear(k4, HIDDEN[1], 1)
    return dict(w1=w1, b1=b1, w2=w2, b2=b2, wa=wa, ba=ba, ws=ws, bs=bs)


def qnetwork_reference(x, p, *, use_dueling):
    """f32 reference from the RAW (unfused) params, emulating bf16 matmul inputs.

    Deliberately does NOT use the folded head, so it also validates the
    algebraic dueling fold done in prepare_params."""
    c = lambda a: a.astype(jnp.bfloat16).astype(jnp.float32)
    h = jnp.maximum(jnp.dot(c(x), c(p["w1"])) + p["b1"], 0.0)
    h = jnp.maximum(jnp.dot(c(h), c(p["w2"])) + p["b2"], 0.0)
    adv = jnp.dot(c(h), c(p["wa"])) + p["ba"]
    if use_dueling:
        return adv + (jnp.dot(c(h), c(p["ws"])) + p["bs"])
    return adv


def _check(batch, state_size, action_size, key):
    k_param, k_x = jax.random.split(key)
    params = init_params(k_param, state_size, action_size)
    x = jax.random.normal(k_x, (batch, state_size), jnp.float32)
    for use_dueling in (True, False):
        prep = prepare_params(params, use_dueling=use_dueling)  # one-time prep
        out = jax.block_until_ready(qnetwork_forward(x, prep))
        ref = qnetwork_reference(x, params, use_dueling=use_dueling)
        assert out.shape == (batch, action_size)
        np.testing.assert_allclose(
            np.asarray(out), np.asarray(ref), atol=2e-2, rtol=2e-2)


if __name__ == "__main__":
    key = jax.random.PRNGKey(0)
    k_small, k_big = jax.random.split(key)

    # Small-shape check (single grid step).
    _check(batch=8, state_size=32, action_size=4, key=k_small)

    # Larger batch exercises the 2-step parallel grid path with row padding.
    _check(batch=300, state_size=32, action_size=4, key=k_big)

    print("KERNEL_OK")
</pallas_src>

<mosaic_0001>
module attributes {stable_mosaic.version = 11 : i64} {
  func.func @_qnet_kernel(%arg0: i32, %arg1: memref<8x32xf32, #tpu.memory_space<vmem>>, %arg2: memref<32x512xbf16, #tpu.memory_space<vmem>>, %arg3: memref<1x512xbf16, #tpu.memory_space<vmem>>, %arg4: memref<512x128xbf16, #tpu.memory_space<vmem>>, %arg5: memref<1x128xbf16, #tpu.memory_space<vmem>>, %arg6: memref<128x4xbf16, #tpu.memory_space<vmem>>, %arg7: memref<1x4xf32, #tpu.memory_space<vmem>>, %arg8: memref<8x4xf32, #tpu.memory_space<vmem>>) attributes {dimension_semantics = [#tpu.dimension_semantics<parallel>], iteration_bounds = array<i64: 1>, scalar_prefetch = 0 : i64, scratch_operands = 0 : i64, tpu.core_type = #tpu.core_type<tc>, window_params = [{transform_indices = @transform_0, window_bounds = array<i64: 8, 32>}, {pipeline_mode = #tpu.pipeline_mode<synchronous>, transform_indices = @transform_1, window_bounds = array<i64: 32, 512>}, {pipeline_mode = #tpu.pipeline_mode<synchronous>, transform_indices = @transform_2, window_bounds = array<i64: 1, 512>}, {pipeline_mode = #tpu.pipeline_mode<synchronous>, transform_indices = @transform_3, window_bounds = array<i64: 512, 128>}, {pipeline_mode = #tpu.pipeline_mode<synchronous>, transform_indices = @transform_4, window_bounds = array<i64: 1, 128>}, {pipeline_mode = #tpu.pipeline_mode<synchronous>, transform_indices = @transform_5, window_bounds = array<i64: 128, 4>}, {pipeline_mode = #tpu.pipeline_mode<synchronous>, transform_indices = @transform_6, window_bounds = array<i64: 1, 4>}, {transform_indices = @transform_7, window_bounds = array<i64: 8, 4>}]} {
    %c0 = arith.constant 0 : index
    %c0_0 = arith.constant 0 : index
    %0 = vector.load %arg1[%c0, %c0_0] : memref<8x32xf32, #tpu.memory_space<vmem>>, vector<8x32xf32>
    %1 = arith.truncf %0 : vector<8x32xf32> to vector<8x32xbf16>
    %c0_1 = arith.constant 0 : index
    %c0_2 = arith.constant 0 : index
    %2 = vector.load %arg2[%c0_1, %c0_2] : memref<32x512xbf16, #tpu.memory_space<vmem>>, vector<32x512xbf16>
    %cst = arith.constant dense<0.000000e+00> : vector<8x512xf32>
    %3 = tpu.matmul %1, %2, %cst {dimension_numbers = #tpu.dot_dimension_numbers<[1], [0], [0], [1], [0, 0, 1, 1], [], []>} : vector<8x32xbf16>, vector<32x512xbf16>, vector<8x512xf32> -> vector<8x512xf32>
    %4 = arith.truncf %3 : vector<8x512xf32> to vector<8x512xbf16>
    %c0_3 = arith.constant 0 : index
    %c0_4 = arith.constant 0 : index
    %5 = vector.load %arg3[%c0_3, %c0_4] : memref<1x512xbf16, #tpu.memory_space<vmem>>, vector<1x512xbf16>
    %6 = vector.broadcast %5 : vector<1x512xbf16> to vector<8x512xbf16>
    %7 = arith.addf %4, %6 : vector<8x512xbf16>
    %cst_5 = arith.constant 0.000000e+00 : bf16
    %8 = vector.broadcast %cst_5 : bf16 to vector<8x512xbf16>
    %9 = arith.maximumf %7, %8 : vector<8x512xbf16>
    %c0_6 = arith.constant 0 : index
    %c0_7 = arith.constant 0 : index
    %10 = vector.load %arg4[%c0_6, %c0_7] : memref<512x128xbf16, #tpu.memory_space<vmem>>, vector<512x128xbf16>
    %cst_8 = arith.constant dense<0.000000e+00> : vector<8x128xf32>
    %11 = tpu.matmul %9, %10, %cst_8 {dimension_numbers = #tpu.dot_dimension_numbers<[1], [0], [0], [1], [0, 0, 1, 1], [], []>} : vector<8x512xbf16>, vector<512x128xbf16>, vector<8x128xf32> -> vector<8x128xf32>
    %12 = arith.truncf %11 : vector<8x128xf32> to vector<8x128xbf16>
    %c0_9 = arith.constant 0 : index
    %c0_10 = arith.constant 0 : index
    %13 = vector.load %arg5[%c0_9, %c0_10] : memref<1x128xbf16, #tpu.memory_space<vmem>>, vector<1x128xbf16>
    %14 = vector.broadcast %13 : vector<1x128xbf16> to vector<8x128xbf16>
    %15 = arith.addf %12, %14 : vector<8x128xbf16>
    %cst_11 = arith.constant 0.000000e+00 : bf16
    %16 = vector.broadcast %cst_11 : bf16 to vector<8x128xbf16>
    %17 = arith.maximumf %15, %16 : vector<8x128xbf16>
    %c0_12 = arith.constant 0 : index
    %c0_13 = arith.constant 0 : index
    %18 = vector.load %arg6[%c0_12, %c0_13] : memref<128x4xbf16, #tpu.memory_space<vmem>>, vector<128x4xbf16>
    %cst_14 = arith.constant dense<0.000000e+00> : vector<8x4xf32>
    %19 = tpu.matmul %17, %18, %cst_14 {dimension_numbers = #tpu.dot_dimension_numbers<[1], [0], [0], [1], [0, 0, 1, 1], [], []>} : vector<8x128xbf16>, vector<128x4xbf16>, vector<8x4xf32> -> vector<8x4xf32>
    %c0_15 = arith.constant 0 : index
    %c0_16 = arith.constant 0 : index
    %20 = vector.load %arg7[%c0_15, %c0_16] : memref<1x4xf32, #tpu.memory_space<vmem>>, vector<1x4xf32>
    %21 = vector.broadcast %20 : vector<1x4xf32> to vector<8x4xf32>
    %22 = arith.addf %19, %21 : vector<8x4xf32>
    %c0_17 = arith.constant 0 : index
    %c0_18 = arith.constant 0 : index
    %23 = vector.load %arg8[%c0_17, %c0_18] : memref<8x4xf32, #tpu.memory_space<vmem>>, vector<8x4xf32>
    tpu.vector_store %arg8[%c0_17, %c0_18], %22 {strides = array<i32>} : memref<8x4xf32, #tpu.memory_space<vmem>>, vector<8x4xf32>,
    return
  }
  func.func @transform_0(%arg0: i32) -> (i32, i32) {
    %c0_i32 = arith.constant 0 : i32
    %c0_i32_0 = arith.constant 0 : i32
    return %arg0, %c0_i32 : i32, i32
  }
  func.func @transform_1(%arg0: i32) -> (i32, i32) {
    %c0_i32 = arith.constant 0 : i32
    %c0_i32_0 = arith.constant 0 : i32
    %c0_i32_1 = arith.constant 0 : i32
    return %c0_i32, %c0_i32_0 : i32, i32
  }
  func.func @transform_2(%arg0: i32) -> (i32, i32) {
    %c0_i32 = arith.constant 0 : i32
    %c0_i32_0 = arith.constant 0 : i32
    %c0_i32_1 = arith.constant 0 : i32
    return %c0_i32, %c0_i32_0 : i32, i32
  }
  func.func @transform_3(%arg0: i32) -> (i32, i32) {
    %c0_i32 = arith.constant 0 : i32
    %c0_i32_0 = arith.constant 0 : i32
    %c0_i32_1 = arith.constant 0 : i32
    return %c0_i32, %c0_i32_0 : i32, i32
  }
  func.func @transform_4(%arg0: i32) -> (i32, i32) {
    %c0_i32 = arith.constant 0 : i32
    %c0_i32_0 = arith.constant 0 : i32
    %c0_i32_1 = arith.constant 0 : i32
    return %c0_i32, %c0_i32_0 : i32, i32
  }
  func.func @transform_5(%arg0: i32) -> (i32, i32) {
    %c0_i32 = arith.constant 0 : i32
    %c0_i32_0 = arith.constant 0 : i32
    %c0_i32_1 = arith.constant 0 : i32
    return %c0_i32, %c0_i32_0 : i32, i32
  }
  func.func @transform_6(%arg0: i32) -> (i32, i32) {
    %c0_i32 = arith.constant 0 : i32
    %c0_i32_0 = arith.constant 0 : i32
    %c0_i32_1 = arith.constant 0 : i32
    return %c0_i32, %c0_i32_0 : i32, i32
  }
  func.func @transform_7(%arg0: i32) -> (i32, i32) {
    %c0_i32 = arith.constant 0 : i32
    %c0_i32_0 = arith.constant 0 : i32
    return %arg0, %c0_i32 : i32, i32
  }
}

</mosaic_0001>

<llo_original>
// kernel: qnetwork_forward.1
$region0: #{qnetwork_forward.1}
  #allocation0 [shape = 'u32[]', space=smem, size = 0x4, offset = 0x4, fixed_abs, tag = 'smem constant byte address 0x4 - core index']
  #allocation1 [shape = 'u32[144,128]{1,0:T(1,128)}', space=vmem, size = 0x12000, scoped, tag = 'internal scratch']
  %s0 = inlined_call_operand.vmem [shape: f32[8,32], index: 0, kind: input, shape index: {}]
  %s1 = inlined_call_operand.vmem [shape: bf16[32,512], index: 1, kind: input, shape index: {}]
  %s2 = inlined_call_operand.vmem [shape: bf16[1,512], index: 2, kind: input, shape index: {}]
  %s3 = inlined_call_operand.hbm [shape: bf16[512,128], index: 3, kind: input, shape index: {}]
  %s4 = inlined_call_operand.vmem [shape: bf16[1,128], index: 4, kind: input, shape index: {}]
  %s5 = inlined_call_operand.vmem [shape: bf16[128,4], index: 5, kind: input, shape index: {}]
  %s6 = inlined_call_operand.vmem [shape: f32[1,4], index: 6, kind: input, shape index: {}]
  %s7 = inlined_call_operand.vmem [shape: f32[8,4], index: 7, kind: output, shape index: {}]
  %s8 = sld [smem:[#allocation0]]
  $region42: #{qnetwork_forward.1} parent=0
    _
  %s10 = ssub.s32 1, %s8
  %s11 = scalar_select 0, %s10, %s8
  $region1: #{qnetwork_forward.1} parent=0
    #allocation2 [shape = 'u8[131072]{0}', space=vmem, size = 0x20000, scoped, tag = 'input window, operand 3, single buffered']
    #allocation3 [shape = 's32[1]{0}', space=sflag, size = 0x4, scoped, tag = 'scoped memory for qnetwork_forward.1']
    %12 = vsyncpa [#allocation3], 0
    // Predicated region
    $region2: #{qnetwork_forward.1} parent=1 // pred_check
      _
    $region3: #{qnetwork_forward.1} parent=1 // pred_check_branch
      %14 = sbr.rel (0) target = $region5
    $region4: #{qnetwork_forward.1} parent=1 // pred_region
      _
    $region5: #{qnetwork_forward.1} parent=1 // pred_fallthru
      _
    // Predicated region
    $region6: #{qnetwork_forward.1} parent=1 // pred_check
      _
    $region7: #{qnetwork_forward.1} parent=1 // pred_check_branch
      %16 = sbr.rel (0) target = $region9
    $region8: #{qnetwork_forward.1} parent=1 // pred_region
      _
    $region9: #{qnetwork_forward.1} parent=1 // pred_fallthru
      _
    // Predicated region
    $region10: #{qnetwork_forward.1} parent=1 // pred_check
      _
    $region11: #{qnetwork_forward.1} parent=1 // pred_check_branch
      %18 = sbr.rel (0) target = $region13
    $region12: #{qnetwork_forward.1} parent=1 // pred_region
      _
    $region13: #{qnetwork_forward.1} parent=1 // pred_fallthru
      _
    // Predicated region
    $region14: #{qnetwork_forward.1} parent=1 // pred_check
      _
    $region15: #{qnetwork_forward.1} parent=1 // pred_check_branch
      %20 = sbr.rel (0) target = $region17
    $region16: #{qnetwork_forward.1} parent=1 // pred_region
      %s22 = ssub.s32 4096, 4096
      %23 = vsyncadd [#allocation3], %s22
      %s24 = sshll.u32 [#allocation2], 4
      %s25 = int_to_ptr.vmem [resolvable:$true] %s24
      %30 = dma.hbm_to_vmem [thread:$0]  %s3, 4096, %s25, [#allocation3], 64, 64, 4
    $region17: #{qnetwork_forward.1} parent=1 // pred_fallthru
      _
    // Predicated region
    $region18: #{qnetwork_forward.1} parent=1 // pred_check
      _
    $region19: #{qnetwork_forward.1} parent=1 // pred_check_branch
      %32 = sbr.rel (0) target = $region21
    $region20: #{qnetwork_forward.1} parent=1 // pred_region
      _
    $region21: #{qnetwork_forward.1} parent=1 // pred_fallthru
      _
    // Predicated region
    $region22: #{qnetwork_forward.1} parent=1 // pred_check
      _
    $region23: #{qnetwork_forward.1} parent=1 // pred_check_branch
      %34 = sbr.rel (0) target = $region25
    $region24: #{qnetwork_forward.1} parent=1 // pred_region
      _
    $region25: #{qnetwork_forward.1} parent=1 // pred_fallthru
      _
    // Predicated region
    $region26: #{qnetwork_forward.1} parent=1 // pred_check
      _
    $region27: #{qnetwork_forward.1} parent=1 // pred_check_branch
      %36 = sbr.rel (0) target = $region29
    $region28: #{qnetwork_forward.1} parent=1 // pred_region
      _
    $region29: #{qnetwork_forward.1} parent=1 // pred_fallthru
      _
    // Predicated region
    $region30: #{qnetwork_forward.1} parent=1 // pred_check
      _
    $region31: #{qnetwork_forward.1} parent=1 // pred_check_branch
      %38 = sbr.rel (0) target = $region33
    $region32: #{qnetwork_forward.1} parent=1 // pred_region
      %39 = dma.done [#allocation3], 4096
    $region33: #{qnetwork_forward.1} parent=1 // pred_fallthru
      _
    %v41 = vld [vmem:[%s0] sm:$0xff]
    %v42 = vpack.c.bf16 %v41, %v41
    %v43 = vld [vmem:[%s1] sm:$0xff]
    %v44 = vld [vmem:[%s1 + $0x8] sm:$0xff]
    %v45 = vld [vmem:[%s1 + $0x10] sm:$0xff]
    %v46 = vld [vmem:[%s1 + $0x18] sm:$0xff]
    %v47 = vld [vmem:[%s1 + $0x20] sm:$0xff]
    %v48 = vld [vmem:[%s1 + $0x28] sm:$0xff]
    %v49 = vld [vmem:[%s1 + $0x30] sm:$0xff]
    %v50 = vld [vmem:[%s1 + $0x38] sm:$0xff]
    %v59 = vunpack.c.l.b16 %v43
    %v60 = vunpack.c.h.b16 %v43
    %v61 = vunpack.c.l.b16 %v44
    %v62 = vunpack.c.h.b16 %v44
    %v63 = vunpack.c.l.b16 %v45
    %v64 = vunpack.c.h.b16 %v45
    %v65 = vunpack.c.l.b16 %v46
    %v66 = vunpack.c.h.b16 %v46
    %v67 = vunpack.c.l.b16 %v47
    %v68 = vunpack.c.h.b16 %v47
    %v69 = vunpack.c.l.b16 %v48
    %v70 = vunpack.c.h.b16 %v48
    %v71 = vunpack.c.l.b16 %v49
    %v72 = vunpack.c.h.b16 %v49
    %v73 = vunpack.c.l.b16 %v50
    %v74 = vunpack.c.h.b16 %v50
    %v75 = vpack.c.b16 %v63, %v59
    %v76 = vpack.c.b16 %v64, %v60
    %v77 = vpack.c.b16 %v65, %v61
    %v78 = vpack.c.b16 %v66, %v62
    %v79 = vpack.c.b16 %v71, %v67
    %v80 = vpack.c.b16 %v72, %v68
    %v81 = vpack.c.b16 %v73, %v69
    %v82 = vpack.c.b16 %v74, %v70
    %vm91 = vcmask 261120
    %v93 = vsel %vm91, %v42, 0
    %95 = vmatprep.subr.bf16.mxu0 %v76
    %96 = vmatpush1.bf16.msra.mxu0 %v75
    %97 = vmatprep.subr.bf16.mxu0 %v80
    %98 = vmatpush1.bf16.msra.mxu0 %v79
    %99 = vmatprep.subr.bf16.mxu0 0
    %100 = vmatpush1.bf16.msra.mxu0 0
    %101 = vmatprep.subr.bf16.mxu0 0
    %102 = vmatpush1.bf16.msra.mxu0 0
    %103 = vmatprep.subr.bf16.mxu0 0
    %104 = vmatpush1.bf16.msra.mxu0 0
    %105 = vmatprep.subr.bf16.mxu0 0
    %106 = vmatpush1.bf16.msra.mxu0 0
    %107 = vmatprep.subr.bf16.mxu0 0
    %108 = vmatpush1.bf16.msra.mxu0 0
    %109 = vmatprep.subr.bf16.mxu0 0
    %110 = vmatpush1.bf16.msra.mxu0 0
    %111 = vmatprep.subr.bf16.mxu0 0
    %112 = vmatpush1.bf16.msra.mxu0 0
    %113 = vmatprep.subr.bf16.mxu0 0
    %114 = vmatpush1.bf16.msra.mxu0 0
    %115 = vmatprep.subr.bf16.mxu0 0
    %116 = vmatpush1.bf16.msra.mxu0 0
    %117 = vmatprep.subr.bf16.mxu0 0
    %118 = vmatpush1.bf16.msra.mxu0 0
    %119 = vmatprep.subr.bf16.mxu0 0
    %120 = vmatpush1.bf16.msra.mxu0 0
    %121 = vmatprep.subr.bf16.mxu0 0
    %122 = vmatpush1.bf16.msra.mxu0 0
    %123 = vmatprep.subr.bf16.mxu0 0
    %124 = vmatpush1.bf16.msra.mxu0 0
    %125 = vmatprep.subr.bf16.mxu0 0
    %126 = vmatpush1.bf16.msra.mxu0 0
    %127 = vmatprep.mubr.bf16.mxu0 0
    %128 = vmatmul.mubr.bf16.gmra.mrb[0].mxu0 %v93
    %v129 = vpop.f32.mrb[0].mxu0
    %v130 = vadd.f32 0.0, %v129
    %v131 = vpop.f32.mrb[0].mxu0
    %v132 = vadd.f32 0.0, %v131
    %v133 = vpop.f32.mrb[0].mxu0
    %v134 = vpop.f32.mrb[0].mxu0
    %135 = vdwg.mxu0
    %136 = vmatprep.subr.bf16.mxu0 %v78
    %137 = vmatpush1.bf16.msra.mxu0 %v77
    %138 = vmatprep.subr.bf16.mxu0 %v82
    %139 = vmatpush1.bf16.msra.mxu0 %v81
    %140 = vmatprep.subr.bf16.mxu0 0
    %141 = vmatpush1.bf16.msra.mxu0 0
    %142 = vmatprep.subr.bf16.mxu0 0
    %143 = vmatpush1.bf16.msra.mxu0 0
    %144 = vmatprep.subr.bf16.mxu0 0
    %145 = vmatpush1.bf16.msra.mxu0 0
    %146 = vmatprep.subr.bf16.mxu0 0
    %147 = vmatpush1.bf16.msra.mxu0 0
    %148 = vmatprep.subr.bf16.mxu0 0
    %149 = vmatpush1.bf16.msra.mxu0 0
    %150 = vmatprep.subr.bf16.mxu0 0
    %151 = vmatpush1.bf16.msra.mxu0 0
    %152 = vmatprep.subr.bf16.mxu0 0
    %153 = vmatpush1.bf16.msra.mxu0 0
    %154 = vmatprep.subr.bf16.mxu0 0
    %155 = vmatpush1.bf16.msra.mxu0 0
    %156 = vmatprep.subr.bf16.mxu0 0
    %157 = vmatpush1.bf16.msra.mxu0 0
    %158 = vmatprep.subr.bf16.mxu0 0
    %159 = vmatpush1.bf16.msra.mxu0 0
    %160 = vmatprep.subr.bf16.mxu0 0
    %161 = vmatpush1.bf16.msra.mxu0 0
    %162 = vmatprep.subr.bf16.mxu0 0
    %163 = vmatpush1.bf16.msra.mxu0 0
    %164 = vmatprep.subr.bf16.mxu0 0
    %165 = vmatpush1.bf16.msra.mxu0 0
    %166 = vmatprep.subr.bf16.mxu0 0
    %167 = vmatpush1.bf16.msra.mxu0 0
    %168 = vmatprep.mubr.bf16.mxu0 0
    %169 = vmatmul.mubr.bf16.gmra.mrb[0].mxu0 %v93
    %v170 = vpop.f32.mrb[0].mxu0
    %v171 = vadd.f32 0.0, %v170
    %v172 = vpop.f32.mrb[0].mxu0
    %v173 = vadd.f32 0.0, %v172
    %v174 = vpop.f32.mrb[0].mxu0
    %v175 = vpop.f32.mrb[0].mxu0
    %176 = vdwg.mxu0
    %v177 = vpack.c.bf16 %v130, %v130
    %v178 = vpack.c.bf16 %v132, %v132
    %v179 = vpack.c.bf16 %v171, %v171
    %v180 = vpack.c.bf16 %v173, %v173
    %v181 = vld [vmem:[%s2] sm:$0xf]
    %v184 = vunpack.c.l.s4 1966171168
    %v185 = vunpack.c.0.s8 %v184
    %v186 = vlaneseq
    %v187 = vshrl.u32 %v186, 7
    %v188 = vsub.s32 %v185, %v187
    %v189 = vrot.slane %v181, %v188
    %v190 = vcombine.high %v189, %v189
    %v192 = vunpack.c.l.s4 1966171168
    %v193 = vunpack.c.0.s8 %v192
    %v194 = vlaneseq
    %v195 = vshrl.u32 %v194, 7
    %v196 = vsub.s32 %v193, %v195
    %v197 = vrot.slane %v189, %v196
    %v199 = vunpack.c.l.s4 1966171168
    %v200 = vunpack.c.0.s8 %v199
    %v201 = vlaneseq
    %v202 = vshrl.u32 %v201, 7
    %v203 = vsub.s32 %v200, %v202
    %v204 = vrot.slane %v190, %v203
    %v205 = vcombine.high %v197, %v197
    %v206 = vcombine.high %v204, %v204
    %v208 = vpack.i.b16 %v197, %v197
    %v210 = vlaneseq
    %v211 = vshrl.u32 %v210, 7
    %v212 = vsub.s32 0, %v211
    %v213 = vrot.slane %v208, %v212
    %v215 = vpack.i.b16 %v204, %v204
    %v217 = vlaneseq
    %v218 = vshrl.u32 %v217, 7
    %v219 = vsub.s32 0, %v218
    %v220 = vrot.slane %v215, %v219
    %v222 = vpack.i.b16 %v205, %v205
    %v224 = vlaneseq
    %v225 = vshrl.u32 %v224, 7
    %v226 = vsub.s32 0, %v225
    %v227 = vrot.slane %v222, %v226
    %v229 = vpack.i.b16 %v206, %v206
    %v231 = vlaneseq
    %v232 = vshrl.u32 %v231, 7
    %v233 = vsub.s32 0, %v232
    %v234 = vrot.slane %v229, %v233
    %v235 = vadd.bf16 %v177, %v213
    %v236 = vadd.bf16 %v178, %v220
    %v237 = vadd.bf16 %v179, %v227
    %v238 = vadd.bf16 %v180, %v234
    %v239 = vmax.bf16 %v235, 0
    %v240 = vmax.bf16 %v236, 0
    %v241 = vmax.bf16 %v237, 0
    %v242 = vmax.bf16 %v238, 0
    %v243 = vld [vmem:[#allocation2] sm:$0xf]
    %v244 = vld [vmem:[#allocation2 + $0x4] sm:$0xf]
    %v245 = vld [vmem:[#allocation2 + $0x8] sm:$0xf]
    %v246 = vld [vmem:[#allocation2 + $0xc] sm:$0xf]
    %v247 = vld [vmem:[#allocation2 + $0x10] sm:$0xf]
    %v248 = vld [vmem:[#allocation2 + $0x14] sm:$0xf]
    %v249 = vld [vmem:[#allocation2 + $0x18] sm:$0xf]
    %v250 = vld [vmem:[#allocation2 + $0x1c] sm:$0xf]
    %v251 = vld [vmem:[#allocation2 + $0x20] sm:$0xf]
    %v252 = vld [vmem:[#allocation2 + $0x24] sm:$0xf]
    %v253 = vld [vmem:[#allocation2 + $0x28] sm:$0xf]
    %v254 = vld [vmem:[#allocation2 + $0x2c] sm:$0xf]
    %v255 = vld [vmem:[#allocation2 + $0x30] sm:$0xf]
    %v256 = vld [vmem:[#allocation2 + $0x34] sm:$0xf]
    %v257 = vld [vmem:[#allocation2 + $0x38] sm:$0xf]
    %v258 = vld [vmem:[#allocation2 + $0x3c] sm:$0xf]
    %v259 = vld [vmem:[#allocation2 + $0x40] sm:$0xf]
    %v260 = vld [vmem:[#allocation2 + $0x44] sm:$0xf]
    %v261 = vld [vmem:[#allocation2 + $0x48] sm:$0xf]
    %v262 = vld [vmem:[#allocation2 + $0x4c] sm:$0xf]
    %v263 = vld [vmem:[#allocation2 + $0x50] sm:$0xf]
    %v264 = vld [vmem:[#allocation2 + $0x54] sm:$0xf]
    %v265 = vld [vmem:[#allocation2 + $0x58] sm:$0xf]
    %v266 = vld [vmem:[#allocation2 + $0x5c] sm:$0xf]
    %v267 = vld [vmem:[#allocation2 + $0x60] sm:$0xf]
    %v268 = vld [vmem:[#allocation2 + $0x64] sm:$0xf]
    %v269 = vld [vmem:[#allocation2 + $0x68] sm:$0xf]
    %v270 = vld [vmem:[#allocation2 + $0x6c] sm:$0xf]
    %v271 = vld [vmem:[#allocation2 + $0x70] sm:$0xf]
    %v272 = vld [vmem:[#allocation2 + $0x74] sm:$0xf]
    %v273 = vld [vmem:[#allocation2 + $0x78] sm:$0xf]
    %v274 = vld [vmem:[#allocation2 + $0x7c] sm:$0xf]
    %v275 = vld [vmem:[#allocation2 + $0x80] sm:$0xf]
    %v276 = vld [vmem:[#allocation2 + $0x84] sm:$0xf]
    %v277 = vld [vmem:[#allocation2 + $0x88] sm:$0xf]
    %v278 = vld [vmem:[#allocation2 + $0x8c] sm:$0xf]
    %v279 = vld [vmem:[#allocation2 + $0x90] sm:$0xf]
    %v280 = vld [vmem:[#allocation2 + $0x94] sm:$0xf]
    %v281 = vld [vmem:[#allocation2 + $0x98] sm:$0xf]
    %v282 = vld [vmem:[#allocation2 + $0x9c] sm:$0xf]
    %v283 = vld [vmem:[#allocation2 + $0xa0] sm:$0xf]
    %v284 = vld [vmem:[#allocation2 + $0xa4] sm:$0xf]
    %v285 = vld [vmem:[#allocation2 + $0xa8] sm:$0xf]
    %v286 = vld [vmem:[#allocation2 + $0xac] sm:$0xf]
    %v287 = vld [vmem:[#allocation2 + $0xb0] sm:$0xf]
    %v288 = vld [vmem:[#allocation2 + $0xb4] sm:$0xf]
    %v289 = vld [vmem:[#allocation2 + $0xb8] sm:$0xf]
    %v290 = vld [vmem:[#allocation2 + $0xbc] sm:$0xf]
    %v291 = vld [vmem:[#allocation2 + $0xc0] sm:$0xf]
    %v292 = vld [vmem:[#allocation2 + $0xc4] sm:$0xf]
    %v293 = vld [vmem:[#allocation2 + $0xc8] sm:$0xf]
    %v294 = vld [vmem:[#allocation2 + $0xcc] sm:$0xf]
    %v295 = vld [vmem:[#allocation2 + $0xd0] sm:$0xf]
    %v296 = vld [vmem:[#allocation2 + $0xd4] sm:$0xf]
    %v297 = vld [vmem:[#allocation2 + $0xd8] sm:$0xf]
    %v298 = vld [vmem:[#allocation2 + $0xdc] sm:$0xf]
    %v299 = vld [vmem:[#allocation2 + $0xe0] sm:$0xf]
    %v300 = vld [vmem:[#allocation2 + $0xe4] sm:$0xf]
    %v301 = vld [vmem:[#allocation2 + $0xe8] sm:$0xf]
    %v302 = vld [vmem:[#allocation2 + $0xec] sm:$0xf]
    %v303 = vld [vmem:[#allocation2 + $0xf0] sm:$0xf]
    %v304 = vld [vmem:[#allocation2 + $0xf4] sm:$0xf]
    %v305 = vld [vmem:[#allocation2 + $0xf8] sm:$0xf]
    %v306 = vld [vmem:[#allocation2 + $0xfc] sm:$0xf]
    %v371 = vunpack.c.l.b16 %v243
    %v372 = vunpack.c.l.b16 %v244
    %v373 = vunpack.c.l.b16 %v245
    %v374 = vunpack.c.l.b16 %v246
    %v375 = vunpack.c.l.b16 %v247
    %v376 = vunpack.c.l.b16 %v248
    %v377 = vunpack.c.l.b16 %v249
    %v378 = vunpack.c.l.b16 %v250
    %v379 = vunpack.c.l.b16 %v251
    %v380 = vunpack.c.l.b16 %v252
    %v381 = vunpack.c.l.b16 %v253
    %v382 = vunpack.c.l.b16 %v254
    %v383 = vunpack.c.l.b16 %v255
    %v384 = vunpack.c.l.b16 %v256
    %v385 = vunpack.c.l.b16 %v257
    %v386 = vunpack.c.l.b16 %v258
    %v387 = vunpack.c.l.b16 %v259
    %v388 = vunpack.c.l.b16 %v260
    %v389 = vunpack.c.l.b16 %v261
    %v390 = vunpack.c.l.b16 %v262
    %v391 = vunpack.c.l.b16 %v263
    %v392 = vunpack.c.l.b16 %v264
    %v393 = vunpack.c.l.b16 %v265
    %v394 = vunpack.c.l.b16 %v266
    %v395 = vunpack.c.l.b16 %v267
    %v396 = vunpack.c.l.b16 %v268
    %v397 = vunpack.c.l.b16 %v269
    %v398 = vunpack.c.l.b16 %v270
    %v399 = vunpack.c.l.b16 %v271
    %v400 = vunpack.c.l.b16 %v272
    %v401 = vunpack.c.l.b16 %v273
    %v402 = vunpack.c.l.b16 %v274
    %v403 = vunpack.c.l.b16 %v275
    %v404 = vunpack.c.l.b16 %v276
    %v405 = vunpack.c.l.b16 %v277
    %v406 = vunpack.c.l.b16 %v278
    %v407 = vunpack.c.l.b16 %v279
    %v408 = vunpack.c.l.b16 %v280
    %v409 = vunpack.c.l.b16 %v281
    %v410 = vunpack.c.l.b16 %v282
    %v411 = vunpack.c.l.b16 %v283
    %v412 = vunpack.c.l.b16 %v284
    %v413 = vunpack.c.l.b16 %v285
    %v414 = vunpack.c.l.b16 %v286
    %v415 = vunpack.c.l.b16 %v287
    %v416 = vunpack.c.l.b16 %v288
    %v417 = vunpack.c.l.b16 %v289
    %v418 = vunpack.c.l.b16 %v290
    %v419 = vunpack.c.l.b16 %v291
    %v420 = vunpack.c.l.b16 %v292
    %v421 = vunpack.c.l.b16 %v293
    %v422 = vunpack.c.l.b16 %v294
    %v423 = vunpack.c.l.b16 %v295
    %v424 = vunpack.c.l.b16 %v296
    %v425 = vunpack.c.l.b16 %v297
    %v426 = vunpack.c.l.b16 %v298
    %v427 = vunpack.c.l.b16 %v299
    %v428 = vunpack.c.l.b16 %v300
    %v429 = vunpack.c.l.b16 %v301
    %v430 = vunpack.c.l.b16 %v302
    %v431 = vunpack.c.l.b16 %v303
    %v432 = vunpack.c.l.b16 %v304
    %v433 = vunpack.c.l.b16 %v305
    %v434 = vunpack.c.l.b16 %v306
    %v435 = vpack.c.b16 %v372, %v371
    %v436 = vpack.c.b16 %v374, %v373
    %v437 = vpack.c.b16 %v376, %v375
    %v438 = vpack.c.b16 %v378, %v377
    %v439 = vpack.c.b16 %v380, %v379
    %v440 = vpack.c.b16 %v382, %v381
    %v441 = vpack.c.b16 %v384, %v383
    %v442 = vpack.c.b16 %v386, %v385
    %v443 = vpack.c.b16 %v388, %v387
    %v444 = vpack.c.b16 %v390, %v389
    %v445 = vpack.c.b16 %v392, %v391
    %v446 = vpack.c.b16 %v394, %v393
    %v447 = vpack.c.b16 %v396, %v395
    %v448 = vpack.c.b16 %v398, %v397
    %v449 = vpack.c.b16 %v400, %v399
    %v450 = vpack.c.b16 %v402, %v401
    %v451 = vpack.c.b16 %v404, %v403
    %v452 = vpack.c.b16 %v406, %v405
    %v453 = vpack.c.b16 %v408, %v407
    %v454 = vpack.c.b16 %v410, %v409
    %v455 = vpack.c.b16 %v412, %v411
    %v456 = vpack.c.b16 %v414, %v413
    %v457 = vpack.c.b16 %v416, %v415
    %v458 = vpack.c.b16 %v418, %v417
    %v459 = vpack.c.b16 %v420, %v419
    %v460 = vpack.c.b16 %v422, %v421
    %v461 = vpack.c.b16 %v424, %v423
    %v462 = vpack.c.b16 %v426, %v425
    %v463 = vpack.c.b16 %v428, %v427
    %v464 = vpack.c.b16 %v430, %v429
    %v465 = vpack.c.b16 %v432, %v431
    %v466 = vpack.c.b16 %v434, %v433
    %499 = vmatprep.subr.bf16.mxu0 0
    %500 = vmatpush1.bf16.msra.mxu0 %v435
    %501 = vmatprep.subr.bf16.mxu0 0
    %502 = vmatpush1.bf16.msra.mxu0 %v436
    %503 = vmatprep.subr.bf16.mxu0 0
    %504 = vmatpush1.bf16.msra.mxu0 %v437
    %505 = vmatprep.subr.bf16.mxu0 0
    %506 = vmatpush1.bf16.msra.mxu0 %v438
    %507 = vmatprep.subr.bf16.mxu0 0
    %508 = vmatpush1.bf16.msra.mxu0 %v439
    %509 = vmatprep.subr.bf16.mxu0 0
    %510 = vmatpush1.bf16.msra.mxu0 %v440
    %511 = vmatprep.subr.bf16.mxu0 0
    %512 = vmatpush1.bf16.msra.mxu0 %v441
    %513 = vmatprep.subr.bf16.mxu0 0
    %514 = vmatpush1.bf16.msra.mxu0 %v442
    %515 = vmatprep.subr.bf16.mxu0 0
    %516 = vmatpush1.bf16.msra.mxu0 %v443
    %517 = vmatprep.subr.bf16.mxu0 0
    %518 = vmatpush1.bf16.msra.mxu0 %v444
    %519 = vmatprep.subr.bf16.mxu0 0
    %520 = vmatpush1.bf16.msra.mxu0 %v445
    %521 = vmatprep.subr.bf16.mxu0 0
    %522 = vmatpush1.bf16.msra.mxu0 %v446
    %523 = vmatprep.subr.bf16.mxu0 0
    %524 = vmatpush1.bf16.msra.mxu0 %v447
    %525 = vmatprep.subr.bf16.mxu0 0
    %526 = vmatpush1.bf16.msra.mxu0 %v448
    %527 = vmatprep.subr.bf16.mxu0 0
    %528 = vmatpush1.bf16.msra.mxu0 %v449
    %529 = vmatprep.subr.bf16.mxu0 0
    %530 = vmatpush1.bf16.msra.mxu0 %v450
    %531 = vmatprep.mubr.bf16.mxu0 %v240
    %532 = vmatmul.mubr.bf16.gmra.mrb[0].mxu0 %v239
    %v533 = vpop.f32.mrb[0].mxu0
    %v534 = vadd.f32 0.0, %v533
    %v535 = vpop.f32.mrb[0].mxu0
    %v536 = vpop.f32.mrb[0].mxu0
    %v537 = vpop.f32.mrb[0].mxu0
    %538 = vdwg.mxu0
    %539 = vmatprep.subr.bf16.mxu0 0
    %540 = vmatpush1.bf16.msra.mxu0 %v451
    %541 = vmatprep.subr.bf16.mxu0 0
    %542 = vmatpush1.bf16.msra.mxu0 %v452
    %543 = vmatprep.subr.bf16.mxu0 0
    %544 = vmatpush1.bf16.msra.mxu0 %v453
    %545 = vmatprep.subr.bf16.mxu0 0
    %546 = vmatpush1.bf16.msra.mxu0 %v454
    %547 = vmatprep.subr.bf16.mxu0 0
    %548 = vmatpush1.bf16.msra.mxu0 %v455
    %549 = vmatprep.subr.bf16.mxu0 0
    %550 = vmatpush1.bf16.msra.mxu0 %v456
    %551 = vmatprep.subr.bf16.mxu0 0
    %552 = vmatpush1.bf16.msra.mxu0 %v457
    %553 = vmatprep.subr.bf16.mxu0 0
    %554 = vmatpush1.bf16.msra.mxu0 %v458
    %555 = vmatprep.subr.bf16.mxu0 0
    %556 = vmatpush1.bf16.msra.mxu0 %v459
    %557 = vmatprep.subr.bf16.mxu0 0
    %558 = vmatpush1.bf16.msra.mxu0 %v460
    %559 = vmatprep.subr.bf16.mxu0 0
    %560 = vmatpush1.bf16.msra.mxu0 %v461
    %561 = vmatprep.subr.bf16.mxu0 0
    %562 = vmatpush1.bf16.msra.mxu0 %v462
    %563 = vmatprep.subr.bf16.mxu0 0
    %564 = vmatpush1.bf16.msra.mxu0 %v463
    %565 = vmatprep.subr.bf16.mxu0 0
    %566 = vmatpush1.bf16.msra.mxu0 %v464
    %567 = vmatprep.subr.bf16.mxu0 0
    %568 = vmatpush1.bf16.msra.mxu0 %v465
    %569 = vmatprep.subr.bf16.mxu0 0
    %570 = vmatpush1.bf16.msra.mxu0 %v466
    %571 = vmatprep.mubr.bf16.mxu0 %v242
    %572 = vmatmul.mubr.bf16.gmra.mrb[0].mxu0 %v241
    %v573 = vpop.f32.mrb[0].mxu0
    %v574 = vadd.f32 %v534, %v573
    %v575 = vpop.f32.mrb[0].mxu0
    %v576 = vpop.f32.mrb[0].mxu0
    %v577 = vpop.f32.mrb[0].mxu0
    %578 = vdwg.mxu0
    %v579 = vpack.c.bf16 %v574, %v574
    %v580 = vld [vmem:[%s4] sm:$0x1]
    %v582 = vpack.i.b16 %v580, %v580
    %v584 = vlaneseq
    %v585 = vshrl.u32 %v584, 7
    %v586 = vsub.s32 0, %v585
    %v587 = vrot.slane %v582, %v586
    %v588 = vadd.bf16 %v579, %v587
    %v589 = vmax.bf16 %v588, 0
    %v590 = vld [vmem:[%s5] sm:$0xf]
    %v591 = vld [vmem:[%s5 + $0x4] sm:$0xf]
    %v592 = vld [vmem:[%s5 + $0x8] sm:$0xf]
    %v593 = vld [vmem:[%s5 + $0xc] sm:$0xf]
    %v594 = vld [vmem:[%s5 + $0x10] sm:$0xf]
    %v595 = vld [vmem:[%s5 + $0x14] sm:$0xf]
    %v596 = vld [vmem:[%s5 + $0x18] sm:$0xf]
    %v597 = vld [vmem:[%s5 + $0x1c] sm:$0xf]
    %v598 = vld [vmem:[%s5 + $0x20] sm:$0xf]
    %v599 = vld [vmem:[%s5 + $0x24] sm:$0xf]
    %v600 = vld [vmem:[%s5 + $0x28] sm:$0xf]
    %v601 = vld [vmem:[%s5 + $0x2c] sm:$0xf]
    %v602 = vld [vmem:[%s5 + $0x30] sm:$0xf]
    %v603 = vld [vmem:[%s5 + $0x34] sm:$0xf]
    %v604 = vld [vmem:[%s5 + $0x38] sm:$0xf]
    %v605 = vld [vmem:[%s5 + $0x3c] sm:$0xf]
    %v606 = vld [vmem:[%s6] sm:$0x1]
    %v608 = vlaneseq
    %v609 = vshrl.u32 %v608, 7
    %v610 = vsub.s32 0, %v609
    %v611 = vrot.slane %v606, %v610
    %v629 = vunpack.c.l.b16 %v590
    %v630 = vunpack.c.l.b16 %v591
    %v631 = vunpack.c.l.b16 %v592
    %v632 = vunpack.c.l.b16 %v593
    %v633 = vunpack.c.l.b16 %v594
    %v634 = vunpack.c.l.b16 %v595
    %v635 = vunpack.c.l.b16 %v596
    %v636 = vunpack.c.l.b16 %v597
    %v637 = vunpack.c.l.b16 %v598
    %v638 = vunpack.c.l.b16 %v599
    %v639 = vunpack.c.l.b16 %v600
    %v640 = vunpack.c.l.b16 %v601
    %v641 = vunpack.c.l.b16 %v602
    %v642 = vunpack.c.l.b16 %v603
    %v643 = vunpack.c.l.b16 %v604
    %v644 = vunpack.c.l.b16 %v605
    %v645 = vpack.c.b16 %v630, %v629
    %v646 = vpack.c.b16 %v632, %v631
    %v647 = vpack.c.b16 %v634, %v633
    %v648 = vpack.c.b16 %v636, %v635
    %v649 = vpack.c.b16 %v638, %v637
    %v650 = vpack.c.b16 %v640, %v639
    %v651 = vpack.c.b16 %v642, %v641
    %v652 = vpack.c.b16 %v644, %v643
    %661 = vmatprep.subr.bf16.mxu0 0
    %662 = vmatpush1.bf16.msra.mxu0 %v645
    %663 = vmatprep.subr.bf16.mxu0 0
    %664 = vmatpush1.bf16.msra.mxu0 %v646
    %665 = vmatprep.subr.bf16.mxu0 0
    %666 = vmatpush1.bf16.msra.mxu0 %v647
    %667 = vmatprep.subr.bf16.mxu0 0
    %668 = vmatpush1.bf16.msra.mxu0 %v648
    %669 = vmatprep.subr.bf16.mxu0 0
    %670 = vmatpush1.bf16.msra.mxu0 %v649
    %671 = vmatprep.subr.bf16.mxu0 0
    %672 = vmatpush1.bf16.msra.mxu0 %v650
    %673 = vmatprep.subr.bf16.mxu0 0
    %674 = vmatpush1.bf16.msra.mxu0 %v651
    %675 = vmatprep.subr.bf16.mxu0 0
    %676 = vmatpush1.bf16.msra.mxu0 %v652
    %677 = vmatprep.subr.bf16.mxu0 0
    %678 = vmatpush1.bf16.msra.mxu0 0
    %679 = vmatprep.subr.bf16.mxu0 0
    %680 = vmatpush1.bf16.msra.mxu0 0
    %681 = vmatprep.subr.bf16.mxu0 0
    %682 = vmatpush1.bf16.msra.mxu0 0
    %683 = vmatprep.subr.bf16.mxu0 0
    %684 = vmatpush1.bf16.msra.mxu0 0
    %685 = vmatprep.subr.bf16.mxu0 0
    %686 = vmatpush1.bf16.msra.mxu0 0
    %687 = vmatprep.subr.bf16.mxu0 0
    %688 = vmatpush1.bf16.msra.mxu0 0
    %689 = vmatprep.subr.bf16.mxu0 0
    %690 = vmatpush1.bf16.msra.mxu0 0
    %691 = vmatprep.subr.bf16.mxu0 0
    %692 = vmatpush1.bf16.msra.mxu0 0
    %693 = vmatprep.mubr.bf16.mxu0 0
    %694 = vmatmul.mubr.bf16.gmra.mrb[0].mxu0 %v589
    %v695 = vpop.f32.mrb[0].mxu0
    %v696 = vadd.f32 %v611, %v695
    %v697 = vpop.f32.mrb[0].mxu0
    %v698 = vpop.f32.mrb[0].mxu0
    %v699 = vpop.f32.mrb[0].mxu0
    %700 = vdwg.mxu0
    %vm701 = vcmask 31744
    %702 = vst.msk [vmem:[%s7] sm:$0xff] %vm701, %v696
    // Predicated region
    $region34: #{qnetwork_forward.1} parent=1 // pred_check
      _
    $region35: #{qnetwork_forward.1} parent=1 // pred_check_branch
      %704 = sbr.rel (0) target = $region37
    $region36: #{qnetwork_forward.1} parent=1 // pred_region
      _
    $region37: #{qnetwork_forward.1} parent=1 // pred_fallthru
      _
    // Predicated region
    $region38: #{qnetwork_forward.1} parent=1 // pred_check
      _
    $region39: #{qnetwork_forward.1} parent=1 // pred_check_branch
      %706 = sbr.rel (0) target = $region41
    $region40: #{qnetwork_forward.1} parent=1 // pred_region
      _
    $region41: #{qnetwork_forward.1} parent=1 // pred_fallthru
      _
    %707 = vsyncpa [#allocation3], 1

</llo_original>
